<compile_context>
chip_gen: v7x
topology: tpu7x:2x2x1
jax: 0.10.0
libtpu: 0.0.40
codegen_flags: <defaults>
</compile_context>

<pallas_src>
import functools

import numpy as np

import jax
import jax.numpy as jnp
from jax.experimental import pallas as pl
from jax.experimental.pallas import tpu as pltpu


def _sparse_conv_kernel(xa_ref, m_ref, erep_ref, w_ref, b_ref, y_ref, mo_ref,
                        *, K, H, W, Cout, BLK, eps):
    """One image per grid step (all inputs spatially zero-pre-padded).

    xa_ref  : (Hp, Wp*Ca)   bf16  [x, ones] slab, channel-fastest on lanes
                                  (column j = wp*Ca + c), Ca = Cin + 1
    m_ref   : (Hp, Wp)      f32   mask, lane-dense (W on lanes)
    erep_ref: (Wp, Wp*Ca)   bf16  0/1 expansion matrix E[wp, wp*Ca + c] = 1
    w_ref   : (Wp*Ca, K*BLK) bf16 banded weights; per-kh block of BLK columns:
                                  [0, W*Cout)        conv taps for (w, o)
                                  [W*Cout, 2*W*Cout) all-ones sparsity taps,
                                                     replicated per o
    b_ref   : (1, W*Cout)   f32   bias tiled as b[w*Cout + o] = bias[o]
    y_ref   : (H, W*Cout)   f32   lane-dense conv output slab
    mo_ref  : (H, W)        f32   max-pooled mask
    """
    WC = W * Cout

    # ---- single lane-dense mask drives everything ---------------------------
    m = m_ref[...]                                                # (Hp, Wp) f32

    # Expand the mask across the interleaved channel axis with a tiny 0/1
    # matmul (MXU) instead of a cross-lane broadcast; exact for a 0/1 mask.
    m_exp = jnp.dot(m.astype(jnp.bfloat16), erep_ref[...],
                    preferred_element_type=jnp.float32)           # (Hp, Wp*Ca)
    xm = xa_ref[...] * m_exp.astype(jnp.bfloat16)                 # bf16, exact

    # ---- one banded MXU matmul covers all K*K taps + the sparsity counts ----
    acc = jnp.dot(xm, w_ref[...],
                  preferred_element_type=jnp.float32)             # (Hp, K*BLK)

    # kh reduction: lane-tile-aligned column blocks, sublane-shifted rows.
    z = acc[0:H, 0:BLK]
    for kh in range(1, K):
        z = z + acc[kh:kh + H, kh * BLK:(kh + 1) * BLK]           # (H, BLK)

    conv = z[:, 0:WC]                      # conv(x*mask)          (H, W*Cout)
    sp = z[:, WC:2 * WC]                   # conv(mask, ones), replicated per o
    inv = pl.reciprocal(sp + eps, approx=True)                    # EUP slot
    y_ref[...] = jnp.maximum(conv * inv + b_ref[...], 0.0)

    # ---- mask max-pool: separable, lane-dense, f32 ---------------------------
    # (zero padding == -inf padding for a nonnegative 0/1 mask)
    rmax = m[:, 0:W]
    for kw in range(1, K):
        rmax = jnp.maximum(rmax, m[:, kw:kw + W])                 # (Hp, W)
    cmax = rmax[0:H, :]
    for kh in range(1, K):
        cmax = jnp.maximum(cmax, rmax[kh:kh + H, :])              # (H, W)
    mo_ref[...] = cmax


def sparse_conv(x_nchw, mask_nchw, w_conv_oihw, bias, kernel, eps=1e-8):
    """Pallas TPU implementation of SparseConv.forward (inputs/outputs NCHW)."""
    N, Cin, H, W = x_nchw.shape
    Cout = w_conv_oihw.shape[0]
    K = kernel
    p = K // 2
    Hp, Wp = H + 2 * p, W + 2 * p
    Ca = Cin + 1                           # extra all-ones channel -> sparsity
    D = Wp * Ca                            # matmul contraction depth
    WC = W * Cout                          # lane-dense output width (128 here)
    BLK = ((2 * WC + 127) // 128) * 128    # per-kh column block (lane aligned)

    # ---- input slab: NHWC + ones channel, zero-pad, channel-fastest on lanes
    xt = jnp.transpose(x_nchw, (0, 2, 3, 1)).astype(jnp.float32)        # NHWC
    xa = jnp.concatenate([xt, jnp.ones((N, H, W, 1), jnp.float32)], axis=-1)
    xa = jnp.pad(xa, ((0, 0), (p, p), (p, p), (0, 0)))
    xa = xa.reshape(N, Hp, D).astype(jnp.bfloat16)                # bf16 input I/O

    m = jnp.pad(mask_nchw[:, 0].astype(jnp.float32),
                ((0, 0), (p, p), (p, p)))                         # (N, Hp, Wp)

    # ---- constant 0/1 mask-expansion matrix E[wp, wp*Ca + c] = 1 ------------
    erep = jnp.asarray(np.kron(np.eye(Wp, dtype=np.float32),
                               np.ones((1, Ca), np.float32)),
                       dtype=jnp.bfloat16)                        # (Wp, D)

    # ---- banded weights: conv taps + replicated sparsity taps ---------------
    # placement P[w, kw, wp] = 1 iff wp == w + kw (small numpy constant)
    P_np = np.zeros((W, K, Wp), np.float32)
    for w_ in range(W):
        for kw_ in range(K):
            P_np[w_, kw_, w_ + kw_] = 1.0
    P = jnp.asarray(P_np)
    wt = w_conv_oihw.astype(jnp.float32)                          # (Cout,Cin,K,K)
    # conv_band[wp, c, kh, w, o] = wt[o, c, kh, wp - w]  (0 outside the band)
    conv_band = jnp.einsum('wkp,ochk->pchwo', P, wt)
    # sp_band[wp, kh, w, o] = 1 iff 0 <= wp - w < K  (replicated over kh, o)
    psum = jnp.sum(P, axis=1)                                     # (W, Wp)
    sp_band = jnp.broadcast_to(psum.T[:, None, :, None], (Wp, K, W, Cout))

    wbig = jnp.zeros((Wp, Ca, K, BLK), jnp.float32)
    wbig = wbig.at[:, :Cin, :, 0:WC].set(conv_band.reshape(Wp, Cin, K, WC))
    wbig = wbig.at[:, Cin, :, WC:2 * WC].set(sp_band.reshape(Wp, K, WC))
    wband = wbig.reshape(D, K * BLK).astype(jnp.bfloat16)         # (D, K*BLK)

    b_t = jnp.tile(bias.astype(jnp.float32), (W,)).reshape(1, WC)

    kernel_fn = functools.partial(_sparse_conv_kernel, K=K, H=H, W=W,
                                  Cout=Cout, BLK=BLK, eps=eps)

    # honest machine FLOPs (banded matmul + mask-expansion matmul)
    flops = 2 * N * (Hp * D * (K * BLK) + Hp * Wp * D)
    bytes_accessed = (2 * (xa.size + erep.size + wband.size)
                      + 4 * (m.size + b_t.size + N * H * WC + N * H * W))

    # TODO(synk): for large H*W add an H-tile grid axis with a K//2-row halo
    # (element-indexed blocks or a manual halo DMA) so the auto double-buffer
    # has more than N steps to overlap DMA with compute and the v7x megacore
    # gets balanced work; at these demo sizes one image per step fits VMEM
    # with huge headroom.
    y_slab, mo = pl.pallas_call(
        kernel_fn,
        grid=(N,),
        in_specs=[
            pl.BlockSpec((None, Hp, D), lambda n: (n, 0, 0)),
            pl.BlockSpec((None, Hp, Wp), lambda n: (n, 0, 0)),
            pl.BlockSpec((Wp, D), lambda n: (0, 0)),
            pl.BlockSpec((D, K * BLK), lambda n: (0, 0)),
            pl.BlockSpec((1, WC), lambda n: (0, 0)),
        ],
        out_specs=(
            pl.BlockSpec((None, H, WC), lambda n: (n, 0, 0)),
            pl.BlockSpec((None, H, W), lambda n: (n, 0, 0)),
        ),
        out_shape=(
            jax.ShapeDtypeStruct((N, H, WC), jnp.float32),
            jax.ShapeDtypeStruct((N, H, W), jnp.float32),
        ),
        compiler_params=pltpu.CompilerParams(
            dimension_semantics=("parallel",),        # megacore on v7x
            # Sized for v7x's 64 MiB part; raise to ~64-100 MiB on v5e/v6e
            # when enlarging tiles / pipeline depth for big images.
            vmem_limit_bytes=32 * 1024 * 1024,
        ),
        cost_estimate=pl.CostEstimate(
            flops=flops, transcendentals=N * H * WC,
            bytes_accessed=bytes_accessed),
    )(xa, m, erep, wband, b_t)

    # lane-dense slab (N, H, W*Cout) -> NCHW; mask -> (N, 1, H, W)
    y = jnp.transpose(y_slab.reshape(N, H, W, Cout), (0, 3, 1, 2))
    return y, mo[:, None, :, :]


def _reference(x, mask, w_conv, bias, kernel, eps=1e-8):
    """Pure-JAX reference mirroring the PyTorch forward (NCHW)."""
    p = kernel // 2
    xm = x * mask
    conv = jax.lax.conv_general_dilated(
        xm, w_conv, window_strides=(1, 1), padding=[(p, p), (p, p)],
        dimension_numbers=('NCHW', 'OIHW', 'NCHW'))
    w_sp = jnp.ones((1, 1, kernel, kernel), jnp.float32)
    sp = jax.lax.conv_general_dilated(
        mask, w_sp, window_strides=(1, 1), padding=[(p, p), (p, p)],
        dimension_numbers=('NCHW', 'OIHW', 'NCHW'))
    y = conv * (1.0 / (sp + eps))
    y = y + bias[None, :, None, None]
    y = jnp.maximum(y, 0.0)
    mp = jax.lax.reduce_window(
        mask, -jnp.inf, jax.lax.max,
        (1, 1, kernel, kernel), (1, 1, 1, 1),
        [(0, 0), (0, 0), (p, p), (p, p)])
    return y, mp


if __name__ == "__main__":
    N, Cin, Cout, H, W, K = 2, 4, 8, 16, 16, 3

    key = jax.random.PRNGKey(0)
    kx, km, kwt, kb = jax.random.split(key, 4)

    x = jax.random.normal(kx, (N, Cin, H, W), jnp.float32)
    # binary 0/1 mask with one channel (what the (1,1,K,K) sparsity weight implies)
    mask = (jax.random.uniform(km, (N, 1, H, W)) > 0.4).astype(jnp.float32)

    w_conv = 0.1 * jax.random.normal(kwt, (Cout, Cin, K, K), jnp.float32)
    bias = 0.05 * jax.random.normal(kb, (Cout,), jnp.float32)

    fwd = jax.jit(lambda a, b, c, d: sparse_conv(a, b, c, d, K))
    y, m_out = fwd(x, mask, w_conv, bias)
    y = jax.block_until_ready(y)
    m_out = jax.block_until_ready(m_out)

    y_ref, m_ref_out = _reference(x, mask, w_conv, bias, K)

    assert y.shape == (N, Cout, H, W) and m_out.shape == (N, 1, H, W)
    # bf16 MXU operands + approx reciprocal -> slightly looser tolerance than f32.
    assert jnp.allclose(y, y_ref, rtol=1e-2, atol=1e-2), "conv output mismatch"
    assert jnp.allclose(m_out, m_ref_out, rtol=1e-5, atol=1e-5), "mask output mismatch"

    print("KERNEL_OK")
</pallas_src>

<mosaic_0001>
module attributes {stable_mosaic.version = 11 : i64} {
  func.func @_sparse_conv_kernel(%arg0: i32, %arg1: memref<1x18x90xbf16, #tpu.memory_space<vmem>>, %arg2: memref<1x18x18xf32, #tpu.memory_space<vmem>>, %arg3: memref<18x90xbf16, #tpu.memory_space<vmem>>, %arg4: memref<90x768xbf16, #tpu.memory_space<vmem>>, %arg5: memref<1x128xf32, #tpu.memory_space<vmem>>, %arg6: memref<1x16x128xf32, #tpu.memory_space<vmem>>, %arg7: memref<1x16x16xf32, #tpu.memory_space<vmem>>) attributes {dimension_semantics = [#tpu.dimension_semantics<parallel>], iteration_bounds = array<i64: 2>, scalar_prefetch = 0 : i64, scratch_operands = 0 : i64, tpu.core_type = #tpu.core_type<tc>, window_params = [{transform_indices = @transform_0, window_bounds = array<i64: 1, 18, 90>}, {transform_indices = @transform_1, window_bounds = array<i64: 1, 18, 18>}, {pipeline_mode = #tpu.pipeline_mode<synchronous>, transform_indices = @transform_2, window_bounds = array<i64: 18, 90>}, {pipeline_mode = #tpu.pipeline_mode<synchronous>, transform_indices = @transform_3, window_bounds = array<i64: 90, 768>}, {pipeline_mode = #tpu.pipeline_mode<synchronous>, transform_indices = @transform_4, window_bounds = array<i64: 1, 128>}, {transform_indices = @transform_5, window_bounds = array<i64: 1, 16, 128>}, {transform_indices = @transform_6, window_bounds = array<i64: 1, 16, 16>}]} {
    %c0 = arith.constant 0 : index
    %c0_0 = arith.constant 0 : index
    %c0_1 = arith.constant 0 : index
    %0 = vector.load %arg2[%c0, %c0_0, %c0_1] : memref<1x18x18xf32, #tpu.memory_space<vmem>>, vector<1x18x18xf32>
    %1 = vector.shape_cast %0 : vector<1x18x18xf32> to vector<18x18xf32>
    %2 = arith.truncf %1 : vector<18x18xf32> to vector<18x18xbf16>
    %c0_2 = arith.constant 0 : index
    %c0_3 = arith.constant 0 : index
    %3 = vector.load %arg3[%c0_2, %c0_3] : memref<18x90xbf16, #tpu.memory_space<vmem>>, vector<18x90xbf16>
    %cst = arith.constant dense<0.000000e+00> : vector<18x90xf32>
    %4 = tpu.matmul %2, %3, %cst {dimension_numbers = #tpu.dot_dimension_numbers<[1], [0], [0], [1], [0, 0, 1, 1], [], []>} : vector<18x18xbf16>, vector<18x90xbf16>, vector<18x90xf32> -> vector<18x90xf32>
    %c0_4 = arith.constant 0 : index
    %c0_5 = arith.constant 0 : index
    %c0_6 = arith.constant 0 : index
    %5 = vector.load %arg1[%c0_4, %c0_5, %c0_6] : memref<1x18x90xbf16, #tpu.memory_space<vmem>>, vector<1x18x90xbf16>
    %6 = vector.shape_cast %5 : vector<1x18x90xbf16> to vector<18x90xbf16>
    %7 = arith.truncf %4 : vector<18x90xf32> to vector<18x90xbf16>
    %8 = arith.mulf %6, %7 : vector<18x90xbf16>
    %c0_7 = arith.constant 0 : index
    %c0_8 = arith.constant 0 : index
    %9 = vector.load %arg4[%c0_7, %c0_8] : memref<90x768xbf16, #tpu.memory_space<vmem>>, vector<90x768xbf16>
    %cst_9 = arith.constant dense<0.000000e+00> : vector<18x768xf32>
    %10 = tpu.matmul %8, %9, %cst_9 {dimension_numbers = #tpu.dot_dimension_numbers<[1], [0], [0], [1], [0, 0, 1, 1], [], []>} : vector<18x90xbf16>, vector<90x768xbf16>, vector<18x768xf32> -> vector<18x768xf32>
    %11 = vector.extract_strided_slice %10 {offsets = [0, 0], sizes = [16, 256], strides = [1, 1]} : vector<18x768xf32> to vector<16x256xf32>
    %12 = vector.extract_strided_slice %10 {offsets = [1, 256], sizes = [16, 256], strides = [1, 1]} : vector<18x768xf32> to vector<16x256xf32>
    %13 = arith.addf %11, %12 : vector<16x256xf32>
    %14 = vector.extract_strided_slice %10 {offsets = [2, 512], sizes = [16, 256], strides = [1, 1]} : vector<18x768xf32> to vector<16x256xf32>
    %15 = arith.addf %13, %14 : vector<16x256xf32>
    %16 = vector.extract_strided_slice %15 {offsets = [0, 0], sizes = [16, 128], strides = [1, 1]} : vector<16x256xf32> to vector<16x128xf32>
    %17 = vector.extract_strided_slice %15 {offsets = [0, 128], sizes = [16, 128], strides = [1, 1]} : vector<16x256xf32> to vector<16x128xf32>
    %cst_10 = arith.constant 9.99999993E-9 : f32
    %18 = vector.broadcast %cst_10 : f32 to vector<16x128xf32>
    %19 = arith.addf %17, %18 : vector<16x128xf32>
    %20 = tpu.reciprocal %19 {approx = true} : vector<16x128xf32> -> vector<16x128xf32>
    %21 = arith.mulf %16, %20 : vector<16x128xf32>
    %c0_11 = arith.constant 0 : index
    %c0_12 = arith.constant 0 : index
    %22 = vector.load %arg5[%c0_11, %c0_12] : memref<1x128xf32, #tpu.memory_space<vmem>>, vector<1x128xf32>
    %23 = vector.broadcast %22 : vector<1x128xf32> to vector<16x128xf32>
    %24 = arith.addf %21, %23 : vector<16x128xf32>
    %cst_13 = arith.constant 0.000000e+00 : f32
    %25 = vector.broadcast %cst_13 : f32 to vector<16x128xf32>
    %26 = arith.maximumf %24, %25 : vector<16x128xf32>
    %c0_14 = arith.constant 0 : index
    %c0_15 = arith.constant 0 : index
    %c0_16 = arith.constant 0 : index
    %27 = vector.load %arg6[%c0_14, %c0_15, %c0_16] : memref<1x16x128xf32, #tpu.memory_space<vmem>>, vector<1x16x128xf32>
    %28 = vector.shape_cast %27 : vector<1x16x128xf32> to vector<16x128xf32>
    %29 = vector.shape_cast %26 : vector<16x128xf32> to vector<1x16x128xf32>
    tpu.vector_store %arg6[%c0_14, %c0_15, %c0_16], %29 {strides = array<i32>} : memref<1x16x128xf32, #tpu.memory_space<vmem>>, vector<1x16x128xf32>,
    %30 = vector.extract_strided_slice %1 {offsets = [0, 0], sizes = [18, 16], strides = [1, 1]} : vector<18x18xf32> to vector<18x16xf32>
    %31 = vector.extract_strided_slice %1 {offsets = [0, 1], sizes = [18, 16], strides = [1, 1]} : vector<18x18xf32> to vector<18x16xf32>
    %32 = arith.maximumf %30, %31 : vector<18x16xf32>
    %33 = vector.extract_strided_slice %1 {offsets = [0, 2], sizes = [18, 16], strides = [1, 1]} : vector<18x18xf32> to vector<18x16xf32>
    %34 = arith.maximumf %32, %33 : vector<18x16xf32>
    %35 = vector.extract_strided_slice %34 {offsets = [0, 0], sizes = [16, 16], strides = [1, 1]} : vector<18x16xf32> to vector<16x16xf32>
    %36 = vector.extract_strided_slice %34 {offsets = [1, 0], sizes = [16, 16], strides = [1, 1]} : vector<18x16xf32> to vector<16x16xf32>
    %37 = arith.maximumf %35, %36 : vector<16x16xf32>
    %38 = vector.extract_strided_slice %34 {offsets = [2, 0], sizes = [16, 16], strides = [1, 1]} : vector<18x16xf32> to vector<16x16xf32>
    %39 = arith.maximumf %37, %38 : vector<16x16xf32>
    %c0_17 = arith.constant 0 : index
    %c0_18 = arith.constant 0 : index
    %c0_19 = arith.constant 0 : index
    %40 = vector.load %arg7[%c0_17, %c0_18, %c0_19] : memref<1x16x16xf32, #tpu.memory_space<vmem>>, vector<1x16x16xf32>
    %41 = vector.shape_cast %40 : vector<1x16x16xf32> to vector<16x16xf32>
    %42 = vector.shape_cast %39 : vector<16x16xf32> to vector<1x16x16xf32>
    tpu.vector_store %arg7[%c0_17, %c0_18, %c0_19], %42 {strides = array<i32>} : memref<1x16x16xf32, #tpu.memory_space<vmem>>, vector<1x16x16xf32>,
    return
  }
  func.func @transform_0(%arg0: i32) -> (i32, i32, i32) {
    %c0_i32 = arith.constant 0 : i32
    %c0_i32_0 = arith.constant 0 : i32
    %c0_i32_1 = arith.constant 0 : i32
    return %arg0, %c0_i32, %c0_i32_0 : i32, i32, i32
  }
  func.func @transform_1(%arg0: i32) -> (i32, i32, i32) {
    %c0_i32 = arith.constant 0 : i32
    %c0_i32_0 = arith.constant 0 : i32
    %c0_i32_1 = arith.constant 0 : i32
    return %arg0, %c0_i32, %c0_i32_0 : i32, i32, i32
  }
  func.func @transform_2(%arg0: i32) -> (i32, i32) {
    %c0_i32 = arith.constant 0 : i32
    %c0_i32_0 = arith.constant 0 : i32
    %c0_i32_1 = arith.constant 0 : i32
    return %c0_i32, %c0_i32_0 : i32, i32
  }
  func.func @transform_3(%arg0: i32) -> (i32, i32) {
    %c0_i32 = arith.constant 0 : i32
    %c0_i32_0 = arith.constant 0 : i32
    %c0_i32_1 = arith.constant 0 : i32
    return %c0_i32, %c0_i32_0 : i32, i32
  }
  func.func @transform_4(%arg0: i32) -> (i32, i32) {
    %c0_i32 = arith.constant 0 : i32
    %c0_i32_0 = arith.constant 0 : i32
    %c0_i32_1 = arith.constant 0 : i32
    return %c0_i32, %c0_i32_0 : i32, i32
  }
  func.func @transform_5(%arg0: i32) -> (i32, i32, i32) {
    %c0_i32 = arith.constant 0 : i32
    %c0_i32_0 = arith.constant 0 : i32
    %c0_i32_1 = arith.constant 0 : i32
    return %arg0, %c0_i32, %c0_i32_0 : i32, i32, i32
  }
  func.func @transform_6(%arg0: i32) -> (i32, i32, i32) {
    %c0_i32 = arith.constant 0 : i32
    %c0_i32_0 = arith.constant 0 : i32
    %c0_i32_1 = arith.constant 0 : i32
    return %arg0, %c0_i32, %c0_i32_0 : i32, i32, i32
  }
}

</mosaic_0001>

<llo_original>
// kernel: tile.8
$region0: #{tile.8}
  #allocation0 [shape = 's32[1]{0}', space=sflag, size = 0x4, scoped, tag = 'scoped memory for tile.8']
  %s0 = inlined_call_operand.vmem [shape: f32[8], index: 0, kind: input, shape index: {}]
  %s1 = inlined_call_operand.vmem [shape: f32[16,8], index: 1, kind: output, shape index: {}]
  // Predicated region
  $region2: #{tile.8} parent=0 // pred_check
    _
  $region3: #{tile.8} parent=0 // pred_check_branch
    %3 = sbr.rel (0) target = $region5
  $region4: #{tile.8} parent=0 // pred_region
    _
  $region5: #{tile.8} parent=0 // pred_fallthru
    _
  %v4 = vld [vmem:[%s0] ss:$0 sm:$0xff]
  %5 = vst [vmem:[%s1] sm:$0xff] %v4
  %s6 = scalar_lea.vmem %s1, 8
  %7 = vst [vmem:[%s6] sm:$0xff] %v4

// kernel: tile.9
$region0: #{tile.9}
  %s0 = inlined_call_operand.vmem [shape: f32[16,8], index: 0, kind: input, shape index: {}]
  %s1 = inlined_call_operand.vmem [shape: f32[1,128], index: 1, kind: output, shape index: {}]
  $region1: #{tile.9} parent=0
    #allocation0 [shape = 'u8[4096]{0}', space=vmem, size = 0x1000, scoped, tag = 'scoped mem for output reshape']
    %v2 = vld [vmem:[%s0] sm:$0x1]
    %vm3 = vcmask 64512
    %4 = vst.msk [vmem:[#allocation0] sm:$0x1] %vm3, %v2
    %s5 = scalar_lea.vmem %s0, 15
    %v6 = vld [vmem:[%s5] sm:$0x1]
    %7 = vrot.lane.b32.xlu0 %v6, 120
    %v8 = vpop.permute.xlu0 %7
    %vm9 = vcmask 1048512
    %10 = vst.msk [vmem:[#allocation0] sm:$0x1] %vm9, %v8
    %s11 = scalar_lea.vmem %s0, 14
    %v12 = vld [vmem:[%s11] sm:$0x1]
    %13 = vrot.lane.b32.xlu0 %v12, 112
    %v14 = vpop.permute.xlu0 %13
    %vm15 = vcmask 982912
    %16 = vst.msk [vmem:[#allocation0] sm:$0x1] %vm15, %v14
    %s17 = scalar_lea.vmem %s0, 13
    %v18 = vld [vmem:[%s17] sm:$0x1]
    %19 = vrot.lane.b32.xlu0 %v18, 104
    %v20 = vpop.permute.xlu0 %19
    %vm21 = vcmask 917312
    %22 = vst.msk [vmem:[#allocation0] sm:$0x1] %vm21, %v20
    %s23 = scalar_lea.vmem %s0, 12
    %v24 = vld [vmem:[%s23] sm:$0x1]
    %25 = vrot.lane.b32.xlu0 %v24, 96
    %v26 = vpop.permute.xlu0 %25
    %vm27 = vcmask 851712
    %28 = vst.msk [vmem:[#allocation0] sm:$0x1] %vm27, %v26
    %s29 = scalar_lea.vmem %s0, 11
    %v30 = vld [vmem:[%s29] sm:$0x1]
    %31 = vrot.lane.b32.xlu0 %v30, 88
    %v32 = vpop.permute.xlu0 %31
    %vm33 = vcmask 786112
    %34 = vst.msk [vmem:[#allocation0] sm:$0x1] %vm33, %v32
    %s35 = scalar_lea.vmem %s0, 10
    %v36 = vld [vmem:[%s35] sm:$0x1]
    %37 = vrot.lane.b32.xlu0 %v36, 80
    %v38 = vpop.permute.xlu0 %37
    %vm39 = vcmask 720512
    %40 = vst.msk [vmem:[#allocation0] sm:$0x1] %vm39, %v38
    %s41 = scalar_lea.vmem %s0, 9
    %v42 = vld [vmem:[%s41] sm:$0x1]
    %43 = vrot.lane.b32.xlu0 %v42, 72
    %v44 = vpop.permute.xlu0 %43
    %vm45 = vcmask 654912
    %46 = vst.msk [vmem:[#allocation0] sm:$0x1] %vm45, %v44
    %s47 = scalar_lea.vmem %s0, 8
    %v48 = vld [vmem:[%s47] sm:$0x1]
    %49 = vrot.lane.b32.xlu0 %v48, 64
    %v50 = vpop.permute.xlu0 %49
    %vm51 = vcmask 589312
    %52 = vst.msk [vmem:[#allocation0] sm:$0x1] %vm51, %v50
    %s53 = scalar_lea.vmem %s0, 7
    %v54 = vld [vmem:[%s53] sm:$0x1]
    %55 = vrot.lane.b32.xlu0 %v54, 56
    %v56 = vpop.permute.xlu0 %55
    %vm57 = vcmask 523712
    %58 = vst.msk [vmem:[#allocation0] sm:$0x1] %vm57, %v56
    %s59 = scalar_lea.vmem %s0, 6
    %v60 = vld [vmem:[%s59] sm:$0x1]
    %61 = vrot.lane.b32.xlu0 %v60, 48
    %v62 = vpop.permute.xlu0 %61
    %vm63 = vcmask 458112
    %64 = vst.msk [vmem:[#allocation0] sm:$0x1] %vm63, %v62
    %s65 = scalar_lea.vmem %s0, 5
    %v66 = vld [vmem:[%s65] sm:$0x1]
    %67 = vrot.lane.b32.xlu0 %v66, 40
    %v68 = vpop.permute.xlu0 %67
    %vm69 = vcmask 392512
    %70 = vst.msk [vmem:[#allocation0] sm:$0x1] %vm69, %v68
    %s71 = scalar_lea.vmem %s0, 4
    %v72 = vld [vmem:[%s71] sm:$0x1]
    %73 = vrot.lane.b32.xlu0 %v72, 32
    %v74 = vpop.permute.xlu0 %73
    %vm75 = vcmask 326912
    %76 = vst.msk [vmem:[#allocation0] sm:$0x1] %vm75, %v74
    %s77 = scalar_lea.vmem %s0, 3
    %v78 = vld [vmem:[%s77] sm:$0x1]
    %79 = vrot.lane.b32.xlu0 %v78, 24
    %v80 = vpop.permute.xlu0 %79
    %vm81 = vcmask 261312
    %82 = vst.msk [vmem:[#allocation0] sm:$0x1] %vm81, %v80
    %s83 = scalar_lea.vmem %s0, 2
    %v84 = vld [vmem:[%s83] sm:$0x1]
    %85 = vrot.lane.b32.xlu0 %v84, 16
    %v86 = vpop.permute.xlu0 %85
    %vm87 = vcmask 195712
    %88 = vst.msk [vmem:[#allocation0] sm:$0x1] %vm87, %v86
    %s89 = scalar_lea.vmem %s0, 1
    %v90 = vld [vmem:[%s89] sm:$0x1]
    %91 = vrot.lane.b32.xlu0 %v90, 8
    %v92 = vpop.permute.xlu0 %91
    %vm93 = vcmask 130112
    %94 = vst.msk [vmem:[#allocation0] sm:$0x1] %vm93, %v92
    %s96 = sshllo.u32 0, 1
    %v98 = vld [vmem:[#allocation0] sm:%s96]
    %s99 = sshllo.u32 0, 1
    %100 = vst [vmem:[%s1] sm:%s99] %v98

// kernel: _lambda_.1
$region0: #{_lambda_.1}
  #allocation0 [shape = 'u32[]', space=smem, size = 0x4, offset = 0x4, fixed_abs, tag = 'smem constant byte address 0x4 - core index']
  #allocation1 [shape = 'u32[144,128]{1,0:T(1,128)}', space=vmem, size = 0x12000, scoped, tag = 'internal scratch']
  %s0 = inlined_call_operand.vmem [shape: bf16[2,18,90], index: 0, kind: input, shape index: {}]
  %s1 = inlined_call_operand.vmem [shape: f32[2,18,18], index: 1, kind: input, shape index: {}]
  %s2 = inlined_call_operand.vmem [shape: bf16[18,90], index: 2, kind: input, shape index: {}]
  %s3 = inlined_call_operand.vmem [shape: bf16[90,768], index: 3, kind: input, shape index: {}]
  %s4 = inlined_call_operand.vmem [shape: f32[1,128], index: 4, kind: input, shape index: {}]
  %s5 = inlined_call_operand.vmem [shape: f32[2,16,128], index: 5, kind: output, shape index: {0}]
  %s6 = inlined_call_operand.hbm [shape: f32[2,16,16], index: 6, kind: output, shape index: {1}]
  %7 = xla_tuple %s5, %s6
  %s8 = sld [smem:[#allocation0]]
  $region61: #{_lambda_.1} parent=0
    _
  %s10 = ssub.s32 1, %s8
  %s11 = scalar_select 0, %s10, %s8
  $region1: #{_lambda_.1} parent=0
    #allocation2 [shape = 'u8[16384]{0}', space=vmem, size = 0x4000, scoped, tag = 'output window, operand 1']
    #allocation3 [shape = 's32[2]{0}', space=sflag, size = 0x8, scoped, tag = 'scoped memory for _lambda_.1']
    %12 = vsyncpa [#allocation3], 0
    %s13 = scalar_lea.sflag [#allocation3], 1
    %14 = vsyncpa %s13, 0
    loop: start=0, step=1, limit=4
    $region2: #{_lambda_.1} parent=1 // loop_pre_header
      _
    $region3: #{_lambda_.1} parent=1 // loop_header
      %s16 = sphi 0, %s20
      %p17 = scmp.ge.s32.totalorder %s16, 4
      %s26 = sphi 0, %s28
      %s29 = sphi 0, %s26
      %s30 = sphi 0, %s29
      %s46 = sphi 0, %s30
      %s52 = sphi 0, %s54
      %s55 = sphi 0, %s52
      %s56 = sphi 0, %s55
      %s72 = sphi 0, %s56
      %s76 = sphi 0, %s76
      %s78 = sphi 0, %s76
      %s79 = sphi 0, %s78
      %s93 = sphi 0, %s79
      %s97 = sphi 0, %s97
      %s99 = sphi 0, %s97
      %s100 = sphi 0, %s99
      %s114 = sphi 0, %s100
      %s118 = sphi 0, %s118
      %s120 = sphi 0, %s118
      %s121 = sphi 0, %s120
      %s135 = sphi 0, %s121
      %s141 = sphi 0, %s143
      %s144 = sphi 0, %s141
      %s145 = sphi 0, %s144
      %s161 = sphi 0, %s145
      %s167 = sphi 0, %s169
      %s170 = sphi 0, %s167
      %s171 = sphi 0, %s170
      %s187 = sphi 0, %s171
    $region4: #{_lambda_.1} parent=1 // loop_header_branch
      %19 = sbr.rel (%p17) target = $region8
    $region5: #{_lambda_.1} parent=1 // loop_body
      %s21 = ssub.s32 %s16, 1
      %s22 = ssub.s32 %s16, 2
      %s23 = sadd.s32 %s16, 1
      %s24 = ssub.s32 %s16, %s23
      %p25 = scmp.eq.s32.totalorder %s24, 0
      %s27 = sadd.s32 %s26, 1
      %s28 = scalar_select %p25, %s26, %s27
      %p31 = pneg %p25
      %p32 = scmp.eq.s32.totalorder %s16, 1
      %p33 = por %p31, %p32
      %p34 = scmp.ne.s32.totalorder %s26, %s29
      %p35 = scmp.eq.s32.totalorder %s16, 0
      %p36 = por %p34, %p35
      %p37 = scmp.ne.s32.totalorder %s26, %s29
      %p38 = scmp.eq.s32.totalorder %s21, 1
      %p39 = por %p37, %p38
      %p40 = scmp.ne.s32.totalorder %s29, %s30
      %p41 = scmp.eq.s32.totalorder %s21, 0
      %p42 = por %p40, %p41
      %p43 = scmp.ne.s32.totalorder %s29, %s30
      %p44 = scmp.eq.s32.totalorder %s22, 1
      %p45 = por %p43, %p44
      %p47 = scmp.ne.s32.totalorder %s30, %s46
      %p48 = scmp.eq.s32.totalorder %s22, 0
      %p49 = por %p47, %p48
      %s50 = ssub.s32 %s16, %s23
      %p51 = scmp.eq.s32.totalorder %s50, 0
      %s53 = sadd.s32 %s52, 1
      %s54 = scalar_select %p51, %s52, %s53
      %p57 = pneg %p51
      %p58 = scmp.eq.s32.totalorder %s16, 1
      %p59 = por %p57, %p58
      %p60 = scmp.ne.s32.totalorder %s52, %s55
      %p61 = scmp.eq.s32.totalorder %s16, 0
      %p62 = por %p60, %p61
      %p63 = scmp.ne.s32.totalorder %s52, %s55
      %p64 = scmp.eq.s32.totalorder %s21, 1
      %p65 = por %p63, %p64
      %p66 = scmp.ne.s32.totalorder %s55, %s56
      %p67 = scmp.eq.s32.totalorder %s21, 0
      %p68 = por %p66, %p67
      %p69 = scmp.ne.s32.totalorder %s55, %s56
      %p70 = scmp.eq.s32.totalorder %s22, 1
      %p71 = por %p69, %p70
      %p73 = scmp.ne.s32.totalorder %s56, %s72
      %p74 = scmp.eq.s32.totalorder %s22, 0
      %p75 = por %p73, %p74
      %s77 = sadd.s32 %s76, 1
      %p80 = scmp.eq.s32.totalorder %s16, 1
      %p81 = scmp.ne.s32.totalorder %s76, %s78
      %p82 = scmp.eq.s32.totalorder %s16, 0
      %p83 = por %p81, %p82
      %p84 = scmp.ne.s32.totalorder %s76, %s78
      %p85 = scmp.eq.s32.totalorder %s21, 1
      %p86 = por %p84, %p85
      %p87 = scmp.ne.s32.totalorder %s78, %s79
      %p88 = scmp.eq.s32.totalorder %s21, 0
      %p89 = por %p87, %p88
      %p90 = scmp.ne.s32.totalorder %s78, %s79
      %p91 = scmp.eq.s32.totalorder %s22, 1
      %p92 = por %p90, %p91
      %p94 = scmp.ne.s32.totalorder %s79, %s93
      %p95 = scmp.eq.s32.totalorder %s22, 0
      %p96 = por %p94, %p95
      %s98 = sadd.s32 %s97, 1
      %p101 = scmp.eq.s32.totalorder %s16, 1
      %p102 = scmp.ne.s32.totalorder %s97, %s99
      %p103 = scmp.eq.s32.totalorder %s16, 0
      %p104 = por %p102, %p103
      %p105 = scmp.ne.s32.totalorder %s97, %s99
      %p106 = scmp.eq.s32.totalorder %s21, 1
      %p107 = por %p105, %p106
      %p108 = scmp.ne.s32.totalorder %s99, %s100
      %p109 = scmp.eq.s32.totalorder %s21, 0
      %p110 = por %p108, %p109
      %p111 = scmp.ne.s32.totalorder %s99, %s100
      %p112 = scmp.eq.s32.totalorder %s22, 1
      %p113 = por %p111, %p112
      %p115 = scmp.ne.s32.totalorder %s100, %s114
      %p116 = scmp.eq.s32.totalorder %s22, 0
      %p117 = por %p115, %p116
      %s119 = sadd.s32 %s118, 1
      %p122 = scmp.eq.s32.totalorder %s16, 1
      %p123 = scmp.ne.s32.totalorder %s118, %s120
      %p124 = scmp.eq.s32.totalorder %s16, 0
      %p125 = por %p123, %p124
      %p126 = scmp.ne.s32.totalorder %s118, %s120
      %p127 = scmp.eq.s32.totalorder %s21, 1
      %p128 = por %p126, %p127
      %p129 = scmp.ne.s32.totalorder %s120, %s121
      %p130 = scmp.eq.s32.totalorder %s21, 0
      %p131 = por %p129, %p130
      %p132 = scmp.ne.s32.totalorder %s120, %s121
      %p133 = scmp.eq.s32.totalorder %s22, 1
      %p134 = por %p132, %p133
      %p136 = scmp.ne.s32.totalorder %s121, %s135
      %p137 = scmp.eq.s32.totalorder %s22, 0
      %p138 = por %p136, %p137
      %s139 = ssub.s32 %s16, %s23
      %p140 = scmp.eq.s32.totalorder %s139, 0
      %s142 = sadd.s32 %s141, 1
      %s143 = scalar_select %p140, %s141, %s142
      %p146 = pneg %p140
      %p147 = scmp.eq.s32.totalorder %s16, 1
      %p148 = por %p146, %p147
      %p149 = scmp.ne.s32.totalorder %s141, %s144
      %p150 = scmp.eq.s32.totalorder %s16, 0
      %p151 = por %p149, %p150
      %p152 = scmp.ne.s32.totalorder %s141, %s144
      %p153 = scmp.eq.s32.totalorder %s21, 1
      %p154 = por %p152, %p153
      %p155 = scmp.ne.s32.totalorder %s144, %s145
      %p156 = scmp.eq.s32.totalorder %s21, 0
      %p157 = por %p155, %p156
      %p158 = scmp.ne.s32.totalorder %s144, %s145
      %p159 = scmp.eq.s32.totalorder %s22, 1
      %p160 = por %p158, %p159
      %p162 = scmp.ne.s32.totalorder %s145, %s161
      %p163 = scmp.eq.s32.totalorder %s22, 0
      %p164 = por %p162, %p163
      %s165 = ssub.s32 %s16, %s23
      %p166 = scmp.eq.s32.totalorder %s165, 0
      %s168 = sadd.s32 %s167, 1
      %s169 = scalar_select %p166, %s167, %s168
      %p172 = pneg %p166
      %p173 = scmp.eq.s32.totalorder %s16, 1
      %p174 = por %p172, %p173
      %p175 = scmp.ne.s32.totalorder %s167, %s170
      %p176 = scmp.eq.s32.totalorder %s16, 0
      %p177 = por %p175, %p176
      %p178 = scmp.ne.s32.totalorder %s167, %s170
      %p179 = scmp.eq.s32.totalorder %s21, 1
      %p180 = por %p178, %p179
      %p181 = scmp.ne.s32.totalorder %s170, %s171
      %p182 = scmp.eq.s32.totalorder %s21, 0
      %p183 = por %p181, %p182
      %p184 = scmp.ne.s32.totalorder %s170, %s171
      %p185 = scmp.eq.s32.totalorder %s22, 1
      %p186 = por %p184, %p185
      %p188 = scmp.ne.s32.totalorder %s171, %s187
      %p189 = scmp.eq.s32.totalorder %s22, 0
      %p190 = por %p188, %p189
      %p191 = scmp.le.s32.totalorder 1, %s16
      %p192 = scmp.lt.s32.totalorder %s16, 3
      %p193 = pnand %p191, %p192
      %p194 = pneg %p193
      // Predicated region
      $region9: #{_lambda_.1} parent=5 // pred_check
        _
      $region10: #{_lambda_.1} parent=5 // pred_check_branch
        %196 = sbr.rel (%p193) target = $region12
      $region11: #{_lambda_.1} parent=5 // pred_region
        %s197 = ssub.s32 %s16, 1
        // Predicated region
        $region13: #{_lambda_.1} parent=11 // pred_check
          %p198 = pneg %p89
        $region14: #{_lambda_.1} parent=11 // pred_check_branch
          %200 = sbr.rel (%p198) target = $region16
        $region15: #{_lambda_.1} parent=11 // pred_region
          _
        $region16: #{_lambda_.1} parent=11 // pred_fallthru
          _
        // Predicated region
        $region17: #{_lambda_.1} parent=11 // pred_check
          %p201 = pneg %p110
        $region18: #{_lambda_.1} parent=11 // pred_check_branch
          %203 = sbr.rel (%p201) target = $region20
        $region19: #{_lambda_.1} parent=11 // pred_region
          _
        $region20: #{_lambda_.1} parent=11 // pred_fallthru
          _
        // Predicated region
        $region21: #{_lambda_.1} parent=11 // pred_check
          %p204 = pneg %p131
        $region22: #{_lambda_.1} parent=11 // pred_check_branch
          %206 = sbr.rel (%p204) target = $region24
        $region23: #{_lambda_.1} parent=11 // pred_region
          _
        $region24: #{_lambda_.1} parent=11 // pred_fallthru
          _
      $region12: #{_lambda_.1} parent=5 // pred_fallthru
        _
      %p207 = scmp.lt.s32.totalorder %s16, 2
      // Predicated region
      $region25: #{_lambda_.1} parent=5 // pred_check
        %p208 = pneg %p207
      $region26: #{_lambda_.1} parent=5 // pred_check_branch
        %210 = sbr.rel (%p208) target = $region28
      $region27: #{_lambda_.1} parent=5 // pred_region
        // Predicated region
        $region29: #{_lambda_.1} parent=27 // pred_check
          %p211 = pneg %p36
        $region30: #{_lambda_.1} parent=27 // pred_check_branch
          %213 = sbr.rel (%p211) target = $region32
        $region31: #{_lambda_.1} parent=27 // pred_region
          %p214 = scmp.lt.s32.totalorder %s16, 1
          %s215 = scalar_select %p214, %s16, 1
          %s216 = smul.addr %s215, 3
          %s217 = smul.addr %s216, 4
          %s218 = scalar_lea.vmem %s0, %s217
        $region32: #{_lambda_.1} parent=27 // pred_fallthru
          _
        // Predicated region
        $region33: #{_lambda_.1} parent=27 // pred_check
          %p219 = pneg %p62
        $region34: #{_lambda_.1} parent=27 // pred_check_branch
          %221 = sbr.rel (%p219) target = $region36
        $region35: #{_lambda_.1} parent=27 // pred_region
          %p222 = scmp.lt.s32.totalorder %s16, 1
          %s223 = scalar_select %p222, %s16, 1
          %s224 = smul.addr %s223, 3
          %s225 = smul.addr %s224, 8
          %s226 = scalar_lea.vmem %s1, %s225
        $region36: #{_lambda_.1} parent=27 // pred_fallthru
          _
      $region28: #{_lambda_.1} parent=5 // pred_fallthru
        _
      %p227 = scmp.le.s32.totalorder 1, %s16
      %p228 = scmp.lt.s32.totalorder %s16, 3
      %p229 = pnand %p227, %p228
      %p230 = pneg %p229
      // Predicated region
      $region37: #{_lambda_.1} parent=5 // pred_check
        _
      $region38: #{_lambda_.1} parent=5 // pred_check_branch
        %232 = sbr.rel (%p229) target = $region40
      $region39: #{_lambda_.1} parent=5 // pred_region
        %s233 = ssub.s32 %s16, 1
        %p234 = scmp.lt.s32.totalorder %s21, 1
        %s235 = scalar_select %p234, %s21, 1
        %s236 = smul.addr %s235, 3
        %s237 = smul.addr %s236, 4
        %s238 = scalar_lea.vmem %s0, %s237
        %p239 = pneg %p42
        %p240 = pneg %p39
        %p241 = scmp.lt.s32.totalorder %s21, 1
        %s242 = scalar_select %p241, %s21, 1
        %s243 = smul.addr %s242, 3
        %s244 = smul.addr %s243, 8
        %s245 = scalar_lea.vmem %s1, %s244
        %p246 = pneg %p68
        %p247 = pneg %p65
        %p248 = pneg %p89
        %p249 = pneg %p86
        %p250 = pneg %p110
        %p251 = pneg %p107
        %p252 = pneg %p131
        %p253 = pneg %p128
        %p254 = pneg %p157
        %p255 = pneg %p154
        %p256 = scmp.lt.s32.totalorder %s21, 1
        %s257 = scalar_select %p256, %s21, 1
        %s258 = smul.addr %s257, 2
        %s259 = smul.addr %s258, 8
        %s260 = scalar_lea.vmem %s5, %s259
        %p261 = pneg %p183
        %p262 = pneg %p180
        %s263 = sand.u32 %s170, 1
        %s264 = scalar_lea.sflag [#allocation3], %s263
        %s265 = sand.u32 %s170, 1
        %s266 = smul.addr %s265, 16
        %s267 = scalar_lea.vmem [#allocation2], %s266
        %p268 = scmp.lt.s32.totalorder %s21, 1
        %s269 = scalar_select %p268, %s21, 1
        %s270 = smul.addr %s269, 3
        %s271 = smul.addr %s270, 4
        %s272 = scalar_lea.vmem %s0, %s271
        %p273 = scmp.lt.s32.totalorder %s21, 1
        %s274 = scalar_select %p273, %s21, 1
        %s275 = smul.addr %s274, 3
        %s276 = smul.addr %s275, 8
        %s277 = scalar_lea.vmem %s1, %s276
        %p278 = scmp.lt.s32.totalorder %s21, 1
        %s279 = scalar_select %p278, %s21, 1
        %s280 = smul.addr %s279, 2
        %s281 = smul.addr %s280, 8
        %s282 = scalar_lea.vmem %s5, %s281
        %v284 = vld [vmem:[%s277] sm:$0xff]
        %v285 = vld [vmem:[%s277 + $0x8] sm:$0xff]
        %v286 = vld [vmem:[%s277 + $0x10] sm:$0x3]
        %v287 = vpack.c.bf16 %v285, %v284
        %v288 = vpack.c.bf16 %v286, %v286
        %v289 = vld [vmem:[%s2] sm:$0xf]
        %v290 = vld [vmem:[%s2 + $0x4] sm:$0xf]
        %v291 = vld [vmem:[%s2 + $0x8] sm:$0x1]
        %v295 = vunpack.c.l.b16 %v289
        %v296 = vunpack.c.l.b16 %v290
        %v297 = vunpack.c.l.b16 %v291
        %v298 = vpack.c.b16 %v296, %v295
        %v299 = vpack.c.b16 %v297, %v297
        %vm301 = vcmask 146432
        %v303 = vsel %vm301, %v287, 0
        %v306 = vsel %vm301, %v288, 0
        %vm308 = vcmask 1040384
        %v310 = vsel %vm308, %v299, 0
        %312 = vmatprep.subr.bf16.mxu0 0
        %313 = vmatpush1.bf16.msra.mxu0 %v298
        %314 = vmatprep.subr.bf16.mxu0 0
        %315 = vmatpush1.bf16.msra.mxu0 %v310
        %316 = vmatprep.subr.bf16.mxu0 0
        %317 = vmatpush1.bf16.msra.mxu0 0
        %318 = vmatprep.subr.bf16.mxu0 0
        %319 = vmatpush1.bf16.msra.mxu0 0
        %320 = vmatprep.subr.bf16.mxu0 0
        %321 = vmatpush1.bf16.msra.mxu0 0
        %322 = vmatprep.subr.bf16.mxu0 0
        %323 = vmatpush1.bf16.msra.mxu0 0
        %324 = vmatprep.subr.bf16.mxu0 0
        %325 = vmatpush1.bf16.msra.mxu0 0
        %326 = vmatprep.subr.bf16.mxu0 0
        %327 = vmatpush1.bf16.msra.mxu0 0
        %328 = vmatprep.subr.bf16.mxu0 0
        %329 = vmatpush1.bf16.msra.mxu0 0
        %330 = vmatprep.subr.bf16.mxu0 0
        %331 = vmatpush1.bf16.msra.mxu0 0
        %332 = vmatprep.subr.bf16.mxu0 0
        %333 = vmatpush1.bf16.msra.mxu0 0
        %334 = vmatprep.subr.bf16.mxu0 0
        %335 = vmatpush1.bf16.msra.mxu0 0
        %336 = vmatprep.subr.bf16.mxu0 0
        %337 = vmatpush1.bf16.msra.mxu0 0
        %338 = vmatprep.subr.bf16.mxu0 0
        %339 = vmatpush1.bf16.msra.mxu0 0
        %340 = vmatprep.subr.bf16.mxu0 0
        %341 = vmatpush1.bf16.msra.mxu0 0
        %342 = vmatprep.subr.bf16.mxu0 0
        %343 = vmatpush1.bf16.msra.mxu0 0
        %344 = vmatprep.mubr.bf16.mxu0 0
        %345 = vmatmul.mubr.bf16.gmra.mrb[0].mxu0 %v303
        %v346 = vpop.f32.mrb[0].mxu0
        %v347 = vadd.f32 0.0, %v346
        %v348 = vpop.f32.mrb[0].mxu0
        %v349 = vpop.f32.mrb[0].mxu0
        %v350 = vadd.f32 0.0, %v349
        %v351 = vpop.f32.mrb[0].mxu0
        %352 = vmatprep.mubr.bf16.mxu0 0
        %353 = vmatmul.mubr.bf16.gmra.mrb[0].mxu0 %v306
        %v354 = vpop.f32.mrb[0].mxu0
        %v355 = vadd.f32 0.0, %v354
        %v356 = vpop.f32.mrb[0].mxu0
        %v357 = vpop.f32.mrb[0].mxu0
        %v358 = vpop.f32.mrb[0].mxu0
        %359 = vdwg.mxu0
        %v360 = vld [vmem:[%s272] sm:$0xf]
        %v361 = vld [vmem:[%s272 + $0x4] sm:$0xf]
        %v362 = vld [vmem:[%s272 + $0x8] sm:$0x1]
        %v363 = vpack.c.bf16 %v350, %v347
        %v364 = vpack.c.bf16 %v355, %v355
        %v367 = vunpack.c.l.b16 %v363
        %v368 = vunpack.c.h.b16 %v363
        %v369 = vunpack.c.l.b16 %v364
        %v370 = vpack.c.b16 %v367, %v367
        %v371 = vpack.c.b16 %v368, %v368
        %v372 = vpack.c.b16 %v369, %v369
        %v376 = vmul.bf16 %v360, %v370
        %v377 = vmul.bf16 %v361, %v371
        %v378 = vmul.bf16 %v362, %v372
        %v379 = vld [vmem:[%s3] sm:$0xff]
        %v380 = vld [vmem:[%s3 + $0x8] sm:$0xff]
        %v381 = vld [vmem:[%s3 + $0x10] sm:$0xff]
        %v382 = vld [vmem:[%s3 + $0x18] sm:$0xff]
        %v383 = vld [vmem:[%s3 + $0x20] sm:$0xff]
        %v384 = vld [vmem:[%s3 + $0x28] sm:$0xff]
        %v385 = vld [vmem:[%s3 + $0x30] sm:$0xff]
        %v386 = vld [vmem:[%s3 + $0x38] sm:$0xff]
        %v387 = vld [vmem:[%s3 + $0x40] sm:$0xff]
        %v388 = vld [vmem:[%s3 + $0x48] sm:$0xff]
        %v389 = vld [vmem:[%s3 + $0x50] sm:$0xff]
        %v390 = vld [vmem:[%s3 + $0x58] sm:$0xff]
        %v391 = vld [vmem:[%s3 + $0x60] sm:$0xff]
        %v392 = vld [vmem:[%s3 + $0x68] sm:$0xff]
        %v393 = vld [vmem:[%s3 + $0x70] sm:$0xff]
        %v394 = vld [vmem:[%s3 + $0x78] sm:$0xff]
        %v395 = vld [vmem:[%s3 + $0x80] sm:$0xff]
        %v396 = vld [vmem:[%s3 + $0x88] sm:$0xff]
        %v397 = vld [vmem:[%s3 + $0x90] sm:$0xff]
        %v398 = vld [vmem:[%s3 + $0x98] sm:$0xff]
        %v399 = vld [vmem:[%s3 + $0xa0] sm:$0xff]
        %v400 = vld [vmem:[%s3 + $0xa8] sm:$0xff]
        %v401 = vld [vmem:[%s3 + $0xb0] sm:$0xff]
        %v402 = vld [vmem:[%s3 + $0xb8] sm:$0xff]
        %v403 = vld [vmem:[%s3 + $0xc0] sm:$0xff]
        %v404 = vld [vmem:[%s3 + $0xc8] sm:$0xff]
        %v405 = vld [vmem:[%s3 + $0xd0] sm:$0xff]
        %v406 = vld [vmem:[%s3 + $0xd8] sm:$0xff]
        %v407 = vld [vmem:[%s3 + $0xe0] sm:$0xff]
        %v408 = vld [vmem:[%s3 + $0xe8] sm:$0xff]
        %v409 = vld [vmem:[%s3 + $0xf0] sm:$0xff]
        %v410 = vld [vmem:[%s3 + $0xf8] sm:$0xff]
        %v411 = vld [vmem:[%s3 + $0x100] sm:$0xff]
        %v412 = vld [vmem:[%s3 + $0x108] sm:$0x11]
        %v413 = vld [vmem:[%s3 + $0x110] sm:$0x11]
        %v414 = vld [vmem:[%s3 + $0x118] sm:$0x11]
        %v418 = vunpack.c.l.b16 %v376
        %v419 = vunpack.c.l.b16 %v377
        %v420 = vunpack.c.l.b16 %v378
        %v421 = vpack.c.b16 %v419, %v418
        %v422 = vpack.c.b16 %v420, %v420
        %v459 = vunpack.c.l.b16 %v379
        %v460 = vunpack.c.h.b16 %v379
        %v461 = vunpack.c.l.b16 %v380
        %v462 = vunpack.c.h.b16 %v380
        %v463 = vunpack.c.l.b16 %v381
        %v464 = vunpack.c.h.b16 %v381
        %v465 = vunpack.c.l.b16 %v382
        %v466 = vunpack.c.h.b16 %v382
        %v467 = vunpack.c.l.b16 %v383
        %v468 = vunpack.c.h.b16 %v383
        %v469 = vunpack.c.l.b16 %v384
        %v470 = vunpack.c.h.b16 %v384
        %v471 = vunpack.c.l.b16 %v385
        %v472 = vunpack.c.h.b16 %v385
        %v473 = vunpack.c.l.b16 %v386
        %v474 = vunpack.c.h.b16 %v386
        %v475 = vunpack.c.l.b16 %v387
        %v476 = vunpack.c.h.b16 %v387
        %v477 = vunpack.c.l.b16 %v388
        %v478 = vunpack.c.h.b16 %v388
        %v479 = vunpack.c.l.b16 %v389
        %v480 = vunpack.c.h.b16 %v389
        %v481 = vunpack.c.l.b16 %v390
        %v482 = vunpack.c.h.b16 %v390
        %v483 = vunpack.c.l.b16 %v391
        %v484 = vunpack.c.h.b16 %v391
        %v485 = vunpack.c.l.b16 %v392
        %v486 = vunpack.c.h.b16 %v392
        %v487 = vunpack.c.l.b16 %v393
        %v488 = vunpack.c.h.b16 %v393
        %v489 = vunpack.c.l.b16 %v394
        %v490 = vunpack.c.h.b16 %v394
        %v491 = vunpack.c.l.b16 %v395
        %v492 = vunpack.c.h.b16 %v395
        %v493 = vunpack.c.l.b16 %v396
        %v494 = vunpack.c.h.b16 %v396
        %v495 = vunpack.c.l.b16 %v397
        %v496 = vunpack.c.h.b16 %v397
        %v497 = vunpack.c.l.b16 %v398
        %v498 = vunpack.c.h.b16 %v398
        %v499 = vunpack.c.l.b16 %v399
        %v500 = vunpack.c.h.b16 %v399
        %v501 = vunpack.c.l.b16 %v400
        %v502 = vunpack.c.h.b16 %v400
        %v503 = vunpack.c.l.b16 %v401
        %v504 = vunpack.c.h.b16 %v401
        %v505 = vunpack.c.l.b16 %v402
        %v506 = vunpack.c.h.b16 %v402
        %v507 = vunpack.c.l.b16 %v403
        %v508 = vunpack.c.h.b16 %v403
        %v509 = vunpack.c.l.b16 %v404
        %v510 = vunpack.c.h.b16 %v404
        %v511 = vunpack.c.l.b16 %v405
        %v512 = vunpack.c.h.b16 %v405
        %v513 = vunpack.c.l.b16 %v406
        %v514 = vunpack.c.h.b16 %v406
        %v515 = vunpack.c.l.b16 %v407
        %v516 = vunpack.c.h.b16 %v407
        %v517 = vunpack.c.l.b16 %v408
        %v518 = vunpack.c.h.b16 %v408
        %v519 = vunpack.c.l.b16 %v409
        %v520 = vunpack.c.h.b16 %v409
        %v521 = vunpack.c.l.b16 %v410
        %v522 = vunpack.c.h.b16 %v410
        %v523 = vunpack.c.l.b16 %v411
        %v524 = vunpack.c.h.b16 %v411
        %v525 = vunpack.c.l.b16 %v412
        %v526 = vunpack.c.h.b16 %v412
        %v527 = vunpack.c.l.b16 %v413
        %v528 = vunpack.c.h.b16 %v413
        %v529 = vunpack.c.l.b16 %v414
        %v530 = vunpack.c.h.b16 %v414
        %v531 = vpack.c.b16 %v465, %v459
        %v532 = vpack.c.b16 %v466, %v460
        %v533 = vpack.c.b16 %v467, %v461
        %v534 = vpack.c.b16 %v468, %v462
        %v535 = vpack.c.b16 %v469, %v463
        %v536 = vpack.c.b16 %v470, %v464
        %v537 = vpack.c.b16 %v477, %v471
        %v538 = vpack.c.b16 %v478, %v472
        %v539 = vpack.c.b16 %v479, %v473
        %v540 = vpack.c.b16 %v480, %v474
        %v541 = vpack.c.b16 %v481, %v475
        %v542 = vpack.c.b16 %v482, %v476
        %v543 = vpack.c.b16 %v489, %v483
        %v544 = vpack.c.b16 %v490, %v484
        %v545 = vpack.c.b16 %v491, %v485
        %v546 = vpack.c.b16 %v492, %v486
        %v547 = vpack.c.b16 %v493, %v487
        %v548 = vpack.c.b16 %v494, %v488
        %v549 = vpack.c.b16 %v501, %v495
        %v550 = vpack.c.b16 %v502, %v496
        %v551 = vpack.c.b16 %v503, %v497
        %v552 = vpack.c.b16 %v504, %v498
        %v553 = vpack.c.b16 %v505, %v499
        %v554 = vpack.c.b16 %v506, %v500
        %v555 = vpack.c.b16 %v513, %v507
        %v556 = vpack.c.b16 %v514, %v508
        %v557 = vpack.c.b16 %v515, %v509
        %v558 = vpack.c.b16 %v516, %v510
        %v559 = vpack.c.b16 %v517, %v511
        %v560 = vpack.c.b16 %v518, %v512
        %v561 = vpack.c.b16 %v525, %v519
        %v562 = vpack.c.b16 %v526, %v520
        %v563 = vpack.c.b16 %v527, %v521
        %v564 = vpack.c.b16 %v528, %v522
        %v565 = vpack.c.b16 %v529, %v523
        %v566 = vpack.c.b16 %v530, %v524
        %vm597 = vcmask 736256
        %v599 = vsel %vm597, %v421, 0
        %v602 = vsel %vm597, %v422, 0
        %vm604 = vcmask 1044480
        %v606 = vsel %vm604, %v561, 0
        %v609 = vsel %vm604, %v562, 0
        %v612 = vsel %vm604, %v563, 0
        %v615 = vsel %vm604, %v564, 0
        %v618 = vsel %vm604, %v565, 0
        %v621 = vsel %vm604, %v566, 0
        %623 = vmatprep.subr.bf16.mxu0 %v532
        %624 = vmatpush1.bf16.msra.mxu0 %v531
        %625 = vmatprep.subr.bf16.mxu0 %v538
        %626 = vmatpush1.bf16.msra.mxu0 %v537
        %627 = vmatprep.subr.bf16.mxu0 %v544
        %628 = vmatpush1.bf16.msra.mxu0 %v543
        %629 = vmatprep.subr.bf16.mxu0 %v550
        %630 = vmatpush1.bf16.msra.mxu0 %v549
        %631 = vmatprep.subr.bf16.mxu0 %v556
        %632 = vmatpush1.bf16.msra.mxu0 %v555
        %633 = vmatprep.subr.bf16.mxu0 %v609
        %634 = vmatpush1.bf16.msra.mxu0 %v606
        %635 = vmatprep.subr.bf16.mxu0 0
        %636 = vmatpush1.bf16.msra.mxu0 0
        %637 = vmatprep.subr.bf16.mxu0 0
        %638 = vmatpush1.bf16.msra.mxu0 0
        %639 = vmatprep.subr.bf16.mxu0 0
        %640 = vmatpush1.bf16.msra.mxu0 0
        %641 = vmatprep.subr.bf16.mxu0 0
        %642 = vmatpush1.bf16.msra.mxu0 0
        %643 = vmatprep.subr.bf16.mxu0 0
        %644 = vmatpush1.bf16.msra.mxu0 0
        %645 = vmatprep.subr.bf16.mxu0 0
        %646 = vmatpush1.bf16.msra.mxu0 0
        %647 = vmatprep.subr.bf16.mxu0 0
        %648 = vmatpush1.bf16.msra.mxu0 0
        %649 = vmatprep.subr.bf16.mxu0 0
        %650 = vmatpush1.bf16.msra.mxu0 0
        %651 = vmatprep.subr.bf16.mxu0 0
        %652 = vmatpush1.bf16.msra.mxu0 0
        %653 = vmatprep.subr.bf16.mxu0 0
        %654 = vmatpush1.bf16.msra.mxu0 0
        %655 = vmatprep.mubr.bf16.mxu0 0
        %656 = vmatmul.mubr.bf16.gmra.mrb[0].mxu0 %v599
        %v657 = vpop.f32.mrb[0].mxu0
        %v658 = vadd.f32 0.0, %v657
        %v659 = vpop.f32.mrb[0].mxu0
        %v660 = vadd.f32 0.0, %v659
        %v661 = vpop.f32.mrb[0].mxu0
        %v662 = vadd.f32 0.0, %v661
        %v663 = vpop.f32.mrb[0].mxu0
        %v664 = vadd.f32 0.0, %v663
        %665 = vmatprep.mubr.bf16.mxu0 0
        %666 = vmatmul.mubr.bf16.gmra.mrb[0].mxu0 %v602
        %v667 = vpop.f32.mrb[0].mxu0
        %v668 = vpop.f32.mrb[0].mxu0
        %v669 = vpop.f32.mrb[0].mxu0
        %v670 = vpop.f32.mrb[0].mxu0
        %671 = vdwg.mxu0
        %672 = vmatprep.subr.bf16.mxu0 %v534
        %673 = vmatpush1.bf16.msra.mxu0 %v533
        %674 = vmatprep.subr.bf16.mxu0 %v540
        %675 = vmatpush1.bf16.msra.mxu0 %v539
        %676 = vmatprep.subr.bf16.mxu0 %v546
        %677 = vmatpush1.bf16.msra.mxu0 %v545
        %678 = vmatprep.subr.bf16.mxu0 %v552
        %679 = vmatpush1.bf16.msra.mxu0 %v551
        %680 = vmatprep.subr.bf16.mxu0 %v558
        %681 = vmatpush1.bf16.msra.mxu0 %v557
        %682 = vmatprep.subr.bf16.mxu0 %v615
        %683 = vmatpush1.bf16.msra.mxu0 %v612
        %684 = vmatprep.subr.bf16.mxu0 0
        %685 = vmatpush1.bf16.msra.mxu0 0
        %686 = vmatprep.subr.bf16.mxu0 0
        %687 = vmatpush1.bf16.msra.mxu0 0
        %688 = vmatprep.subr.bf16.mxu0 0
        %689 = vmatpush1.bf16.msra.mxu0 0
        %690 = vmatprep.subr.bf16.mxu0 0
        %691 = vmatpush1.bf16.msra.mxu0 0
        %692 = vmatprep.subr.bf16.mxu0 0
        %693 = vmatpush1.bf16.msra.mxu0 0
        %694 = vmatprep.subr.bf16.mxu0 0
        %695 = vmatpush1.bf16.msra.mxu0 0
        %696 = vmatprep.subr.bf16.mxu0 0
        %697 = vmatpush1.bf16.msra.mxu0 0
        %698 = vmatprep.subr.bf16.mxu0 0
        %699 = vmatpush1.bf16.msra.mxu0 0
        %700 = vmatprep.subr.bf16.mxu0 0
        %701 = vmatpush1.bf16.msra.mxu0 0
        %702 = vmatprep.subr.bf16.mxu0 0
        %703 = vmatpush1.bf16.msra.mxu0 0
        %704 = vmatprep.mubr.bf16.mxu0 0
        %705 = vmatmul.mubr.bf16.gmra.mrb[0].mxu0 %v599
        %v706 = vpop.f32.mrb[0].mxu0
        %v707 = vadd.f32 0.0, %v706
        %v708 = vpop.f32.mrb[0].mxu0
        %v709 = vadd.f32 0.0, %v708
        %v710 = vpop.f32.mrb[0].mxu0
        %v711 = vadd.f32 0.0, %v710
        %v712 = vpop.f32.mrb[0].mxu0
        %v713 = vadd.f32 0.0, %v712
        %714 = vmatprep.mubr.bf16.mxu0 0
        %715 = vmatmul.mubr.bf16.gmra.mrb[0].mxu0 %v602
        %v716 = vpop.f32.mrb[0].mxu0
        %v717 = vadd.f32 0.0, %v716
        %v718 = vpop.f32.mrb[0].mxu0
        %v719 = vadd.f32 0.0, %v718
        %v720 = vpop.f32.mrb[0].mxu0
        %v721 = vpop.f32.mrb[0].mxu0
        %722 = vdwg.mxu0
        %723 = vmatprep.subr.bf16.mxu0 %v536
        %724 = vmatpush1.bf16.msra.mxu0 %v535
        %725 = vmatprep.subr.bf16.mxu0 %v542
        %726 = vmatpush1.bf16.msra.mxu0 %v541
        %727 = vmatprep.subr.bf16.mxu0 %v548
        %728 = vmatpush1.bf16.msra.mxu0 %v547
        %729 = vmatprep.subr.bf16.mxu0 %v554
        %730 = vmatpush1.bf16.msra.mxu0 %v553
        %731 = vmatprep.subr.bf16.mxu0 %v560
        %732 = vmatpush1.bf16.msra.mxu0 %v559
        %733 = vmatprep.subr.bf16.mxu0 %v621
        %734 = vmatpush1.bf16.msra.mxu0 %v618
        %735 = vmatprep.subr.bf16.mxu0 0
        %736 = vmatpush1.bf16.msra.mxu0 0
        %737 = vmatprep.subr.bf16.mxu0 0
        %738 = vmatpush1.bf16.msra.mxu0 0
        %739 = vmatprep.subr.bf16.mxu0 0
        %740 = vmatpush1.bf16.msra.mxu0 0
        %741 = vmatprep.subr.bf16.mxu0 0
        %742 = vmatpush1.bf16.msra.mxu0 0
        %743 = vmatprep.subr.bf16.mxu0 0
        %744 = vmatpush1.bf16.msra.mxu0 0
        %745 = vmatprep.subr.bf16.mxu0 0
        %746 = vmatpush1.bf16.msra.mxu0 0
        %747 = vmatprep.subr.bf16.mxu0 0
        %748 = vmatpush1.bf16.msra.mxu0 0
        %749 = vmatprep.subr.bf16.mxu0 0
        %750 = vmatpush1.bf16.msra.mxu0 0
        %751 = vmatprep.subr.bf16.mxu0 0
        %752 = vmatpush1.bf16.msra.mxu0 0
        %753 = vmatprep.subr.bf16.mxu0 0
        %754 = vmatpush1.bf16.msra.mxu0 0
        %755 = vmatprep.mubr.bf16.mxu0 0
        %756 = vmatmul.mubr.bf16.gmra.mrb[0].mxu0 %v599
        %v757 = vpop.f32.mrb[0].mxu0
        %v758 = vadd.f32 0.0, %v757
        %v759 = vpop.f32.mrb[0].mxu0
        %v760 = vadd.f32 0.0, %v759
        %v761 = vpop.f32.mrb[0].mxu0
        %v762 = vadd.f32 0.0, %v761
        %v763 = vpop.f32.mrb[0].mxu0
        %v764 = vadd.f32 0.0, %v763
        %765 = vmatprep.mubr.bf16.mxu0 0
        %766 = vmatmul.mubr.bf16.gmra.mrb[0].mxu0 %v602
        %v767 = vpop.f32.mrb[0].mxu0
        %v768 = vadd.f32 0.0, %v767
        %v769 = vpop.f32.mrb[0].mxu0
        %v770 = vadd.f32 0.0, %v769
        %v771 = vpop.f32.mrb[0].mxu0
        %v772 = vpop.f32.mrb[0].mxu0
        %773 = vdwg.mxu0
        %vm780 = vcmask 1046528
        %v781 = vrot.slane %v707, 1
        %v782 = vrot.slane %v711, 1
        %v783 = vsel %vm780, %v781, %v782
        %v784 = vrot.slane %v709, 1
        %v785 = vrot.slane %v713, 1
        %v786 = vsel %vm780, %v784, %v785
        %v787 = vrot.slane %v717, 1
        %v788 = vsel %vm780, %v782, %v787
        %v789 = vrot.slane %v719, 1
        %v790 = vsel %vm780, %v785, %v789
        %v795 = vadd.f32 %v658, %v783
        %v796 = vadd.f32 %v660, %v786
        %v797 = vadd.f32 %v662, %v788
        %v798 = vadd.f32 %v664, %v790
        %vm805 = vcmask 1045504
        %v806 = vrot.slane %v758, 2
        %v807 = vrot.slane %v762, 2
        %v808 = vsel %vm805, %v806, %v807
        %v809 = vrot.slane %v760, 2
        %v810 = vrot.slane %v764, 2
        %v811 = vsel %vm805, %v809, %v810
        %v812 = vrot.slane %v768, 2
        %v813 = vsel %vm805, %v807, %v812
        %v814 = vrot.slane %v770, 2
        %v815 = vsel %vm805, %v810, %v814
        %v820 = vadd.f32 %v795, %v808
        %v821 = vadd.f32 %v796, %v811
        %v822 = vadd.f32 %v797, %v813
        %v823 = vadd.f32 %v798, %v815
        %v824 = vadd.f32 %v821, 1e-08
        %v825 = vadd.f32 %v823, 1e-08
        %v826 = vrcp.pop %v824
        %v827 = vrcp.pop %v825
        %v828 = vmul.f32 %v820, %v826
        %v829 = vmul.f32 %v822, %v827
        %v830 = vld [vmem:[%s4] sm:$0x1]
        %v832 = vlaneseq
        %v833 = vshrl.u32 %v832, 7
        %v834 = vsub.s32 0, %v833
        %v835 = vrot.slane %v830, %v834
        %v837 = vadd.f32 %v828, %v835
        %v838 = vadd.f32 %v829, %v835
        %v839 = vmax.f32 %v837, 0.0
        %v840 = vmax.f32 %v838, 0.0
        %841 = vst [vmem:[%s282] sm:$0xff] %v839
        %842 = vst [vmem:[%s282 + $0x8] sm:$0xff] %v840
        %846 = vrot.lane.b32.xlu0 %v284, 127
        %v847 = vpop.permute.xlu0 %846
        %848 = vrot.lane.b32.xlu0 %v285, 127
        %v849 = vpop.permute.xlu0 %848
        %850 = vrot.lane.b32.xlu0 %v286, 127
        %v851 = vpop.permute.xlu0 %850
        %v855 = vmax.f32 %v284, %v847
        %v856 = vmax.f32 %v285, %v849
        %v857 = vmax.f32 %v286, %v851
        %858 = vrot.lane.b32.xlu0 %v284, 126
        %v859 = vpop.permute.xlu0 %858
        %860 = vrot.lane.b32.xlu0 %v285, 126
        %v861 = vpop.permute.xlu0 %860
        %862 = vrot.lane.b32.xlu0 %v286, 126
        %v863 = vpop.permute.xlu0 %862
        %v867 = vmax.f32 %v855, %v859
        %v868 = vmax.f32 %v856, %v861
        %v869 = vmax.f32 %v857, %v863
        %v873 = vrot.slane %v867, 1
        %v874 = vrot.slane %v868, 1
        %v875 = vsel %vm780, %v873, %v874
        %v876 = vrot.slane %v869, 1
        %v877 = vsel %vm780, %v874, %v876
        %v880 = vmax.f32 %v867, %v875
        %v881 = vmax.f32 %v868, %v877
        %v882 = vrot.slane %v867, 2
        %v883 = vrot.slane %v868, 2
        %v884 = vsel %vm805, %v882, %v883
        %v885 = vrot.slane %v869, 2
        %v886 = vsel %vm805, %v883, %v885
        %v889 = vmax.f32 %v880, %v884
        %v890 = vmax.f32 %v881, %v886
        %vm891 = vcmask 130048
        %892 = vst.msk [vmem:[%s267] sm:$0xff] %vm891, %v889
        %893 = vst.msk [vmem:[%s267 + $0x8] sm:$0xff] %vm891, %v890
        %p894 = scmp.lt.s32.totalorder %s21, 1
        %s895 = scalar_select %p894, %s21, 1
        %s896 = smul.addr %s895, 2
        %s897 = smul.addr %s896, 8
        %s898 = scalar_lea.vmem %s5, %s897
        %s899 = sand.u32 %s170, 1
        %s900 = scalar_lea.sflag [#allocation3], %s899
        %s901 = sand.u32 %s170, 1
        %s902 = smul.addr %s901, 16
        %s903 = scalar_lea.vmem [#allocation2], %s902
        // Predicated region
        $region41: #{_lambda_.1} parent=39 // pred_check
          %p904 = pneg %p154
        $region42: #{_lambda_.1} parent=39 // pred_check_branch
          %906 = sbr.rel (%p904) target = $region44
        $region43: #{_lambda_.1} parent=39 // pred_region
          _
        $region44: #{_lambda_.1} parent=39 // pred_fallthru
          _
        // Predicated region
        $region45: #{_lambda_.1} parent=39 // pred_check
          %p907 = pneg %p180
        $region46: #{_lambda_.1} parent=39 // pred_check_branch
          %909 = sbr.rel (%p907) target = $region48
        $region47: #{_lambda_.1} parent=39 // pred_region
          %s911 = ssub.s32 256, 256
          %912 = vsyncadd %s900, %s911
          %s913 = smul.addr %s21, 2
          %s914 = smul.addr %s913, 128
          %s915 = scalar_lea.hbm %s6, %s914
          %s916 = sshll.u32 %s903, 4
          %s917 = int_to_ptr.vmem [resolvable:$true] %s916
          %922 = dma.vmem_to_hbm [thread:$0]  %s917, 256, %s915, %s900, 128, 128, 8
        $region48: #{_lambda_.1} parent=39 // pred_fallthru
          _
      $region40: #{_lambda_.1} parent=5 // pred_fallthru
        _
      %p923 = scmp.le.s32.totalorder 2, %s16
      // Predicated region
      $region49: #{_lambda_.1} parent=5 // pred_check
        %p924 = pneg %p923
      $region50: #{_lambda_.1} parent=5 // pred_check_branch
        %926 = sbr.rel (%p924) target = $region52
      $region51: #{_lambda_.1} parent=5 // pred_region
        %s927 = ssub.s32 %s16, 2
        // Predicated region
        $region53: #{_lambda_.1} parent=51 // pred_check
          %p928 = pneg %p160
        $region54: #{_lambda_.1} parent=51 // pred_check_branch
          %930 = sbr.rel (%p928) target = $region56
        $region55: #{_lambda_.1} parent=51 // pred_region
          %p931 = scmp.lt.s32.totalorder %s22, 1
          %s932 = scalar_select %p931, %s22, 1
          %s933 = smul.addr %s932, 2
          %s934 = smul.addr %s933, 8
          %s935 = scalar_lea.vmem %s5, %s934
        $region56: #{_lambda_.1} parent=51 // pred_fallthru
          _
        // Predicated region
        $region57: #{_lambda_.1} parent=51 // pred_check
          %p936 = pneg %p186
        $region58: #{_lambda_.1} parent=51 // pred_check_branch
          %938 = sbr.rel (%p936) target = $region60
        $region59: #{_lambda_.1} parent=51 // pred_region
          %s939 = sand.u32 %s171, 1
          %s940 = scalar_lea.sflag [#allocation3], %s939
          %s941 = sand.u32 %s171, 1
          %s942 = smul.addr %s941, 16
          %s943 = scalar_lea.vmem [#allocation2], %s942
          %944 = dma.done %s940, 256
        $region60: #{_lambda_.1} parent=51 // pred_fallthru
          _
      $region52: #{_lambda_.1} parent=5 // pred_fallthru
        _
    $region6: #{_lambda_.1} parent=1 // loop_footer
      %s20 = sadd.s32 1, %s16
    $region7: #{_lambda_.1} parent=1 // loop_footer_branch
      %15 = sbr.rel target = $region3
    $region8: #{_lambda_.1} parent=1 // loop_exit
      _
    %945 = vsyncpa [#allocation3], 1
    %s946 = scalar_lea.sflag [#allocation3], 1
    %947 = vsyncpa %s946, 1

</llo_original>
